<compile_context>
chip_gen: v5e
topology: v5e:2x2
jax: 0.10.0
libtpu: 0.0.40
codegen_flags: <defaults>
</compile_context>

<pallas_src>
import functools

import jax
import jax.numpy as jnp
from jax.experimental import pallas as pl
from jax.experimental.pallas import tpu as pltpu


def attention_kernel(x_ref, gamma_ref, beta_ref, wqkv_ref, wo_ref, bout_ref,
                     o_ref, *, bt, seq, heads, dim_head, eps):
  """One grid step: `bt` batch elements (bt*seq rows), all heads.

  x_ref            : (bt*seq, D)         f32
  gamma/beta/b_out : (1, D)              f32
  wqkv_ref         : (3, heads, D, dh)   bf16   (softmax scale folded into wq)
  wo_ref           : (heads, dh, D)      bf16
  o_ref            : (bt*seq, D)
  """
  rows = bt * seq
  x = x_ref[...]                                        # (rows, D) f32
  dim = x.shape[-1]

  # ---- LayerNorm in f32 (biased variance, eps inside sqrt; PyTorch semantics)
  mean = jnp.mean(x, axis=-1, keepdims=True)
  xc = x - mean
  var = jnp.mean(xc * xc, axis=-1, keepdims=True)
  xn = xc * jax.lax.rsqrt(var + eps) * gamma_ref[...] + beta_ref[...]
  xn_b = xn.astype(jnp.bfloat16)                        # bf16 feed to the MXU

  # Output accumulator initialized with the output bias (bias add is free).
  y = jnp.broadcast_to(bout_ref[...], (rows, dim)).astype(jnp.float32)

  for h in range(heads):                                # static unroll
    # Per-head projections over ALL rows (fills MXU M); leading-axis indexing
    # only — no lane-axis slicing of a fused qkv result.
    qh = jnp.dot(xn_b, wqkv_ref[0, h], preferred_element_type=jnp.float32)
    kh = jnp.dot(xn_b, wqkv_ref[1, h], preferred_element_type=jnp.float32)
    vh = jnp.dot(xn_b, wqkv_ref[2, h], preferred_element_type=jnp.float32)

    q3 = qh.reshape(bt, seq, dim_head).astype(jnp.bfloat16)
    k3 = kh.reshape(bt, seq, dim_head).astype(jnp.bfloat16)
    v3 = vh.reshape(bt, seq, dim_head).astype(jnp.bfloat16)

    # Scores: transpose absorbed into the contraction (no explicit k^T).
    s = jnp.einsum('bnd,bmd->bnm', q3, k3,
                   preferred_element_type=jnp.float32)  # (bt, seq, seq) f32

    # Numerically stable softmax in f32; reciprocal goes to the EUP.
    s = s - jnp.max(s, axis=-1, keepdims=True)
    e = jnp.exp(s)
    attn = e * pl.reciprocal(jnp.sum(e, axis=-1, keepdims=True), approx=True)

    oh = jnp.einsum('bnm,bmd->bnd', attn.astype(jnp.bfloat16), v3,
                    preferred_element_type=jnp.float32)  # (bt, seq, dh)

    # Per-head output projection, accumulated (no lane-axis head concat).
    y = y + jnp.dot(oh.reshape(rows, dim_head).astype(jnp.bfloat16),
                    wo_ref[h], preferred_element_type=jnp.float32)

  o_ref[...] = y.astype(o_ref.dtype)


def _pick_batch_tile(batch, seq, target_rows=256):
  """Largest divisor of `batch` whose row count stays near `target_rows`."""
  bt = 1
  for cand in range(1, batch + 1):
    if batch % cand == 0 and cand * seq <= max(target_rows, seq):
      bt = cand
  return bt


def attention_forward(x, params, *, heads, dim_head, eps=1e-5):
  B, N, D = x.shape
  inner = heads * dim_head
  scale = dim_head ** (-0.5)

  # ---- wrapper-side weight relayout (one-time, outside the hot loop) ----
  w_qkv = params["w_qkv"]                               # (D, 3*inner), y = x@W
  wq = w_qkv[:, 0 * inner:1 * inner].reshape(D, heads, dim_head)
  wk = w_qkv[:, 1 * inner:2 * inner].reshape(D, heads, dim_head)
  wv = w_qkv[:, 2 * inner:3 * inner].reshape(D, heads, dim_head)
  wq = (wq * scale).transpose(1, 0, 2)                  # scale folded into wq
  wk = wk.transpose(1, 0, 2)                            # (heads, D, dh)
  wv = wv.transpose(1, 0, 2)
  wqkv = jnp.stack([wq, wk, wv], axis=0).astype(jnp.bfloat16)  # (3,H,D,dh)
  wo = params["w_out"].reshape(heads, dim_head, D).astype(jnp.bfloat16)

  bt = _pick_batch_tile(B, N)
  rows = bt * N
  x2 = x.reshape(B * N, D)                              # free layout reshape

  kernel = functools.partial(attention_kernel, bt=bt, seq=N, heads=heads,
                             dim_head=dim_head, eps=eps)

  out2 = pl.pallas_call(
      kernel,
      out_shape=jax.ShapeDtypeStruct((B * N, D), x.dtype),
      grid_spec=pltpu.PrefetchScalarGridSpec(
          num_scalar_prefetch=0,
          grid=(B // bt,),
          in_specs=[
              pl.BlockSpec((rows, D), lambda i: (i, 0)),                  # x
              pl.BlockSpec((1, D), lambda i: (0, 0)),                     # gamma
              pl.BlockSpec((1, D), lambda i: (0, 0)),                     # beta
              pl.BlockSpec((3, heads, D, dim_head),
                           lambda i: (0, 0, 0, 0)),                       # wqkv
              pl.BlockSpec((heads, dim_head, D), lambda i: (0, 0, 0)),    # wo
              pl.BlockSpec((1, D), lambda i: (0, 0)),                     # b_out
          ],
          out_specs=pl.BlockSpec((rows, D), lambda i: (i, 0)),
      ),
      compiler_params=pltpu.CompilerParams(
          dimension_semantics=("parallel",),
          vmem_limit_bytes=48 * 1024 * 1024),
  )(x2, params["gamma"], params["beta"], wqkv, wo, params["b_out"])

  return out2.reshape(B, N, D)


def reference_forward(x, params, *, heads, dim_head, eps=1e-5):
  """Pure-JAX (f32) reference mirroring the PyTorch module (dropout=0)."""
  mean = jnp.mean(x, axis=-1, keepdims=True)
  var = jnp.mean((x - mean) ** 2, axis=-1, keepdims=True)
  xn = (x - mean) / jnp.sqrt(var + eps) * params["gamma"][0] + params["beta"][0]
  qkv = xn @ params["w_qkv"]
  inner = heads * dim_head
  q, k, v = qkv[..., :inner], qkv[..., inner:2 * inner], qkv[..., 2 * inner:]

  def split_heads(t):
    B, N, _ = t.shape
    return t.reshape(B, N, heads, dim_head).transpose(0, 2, 1, 3)

  q, k, v = map(split_heads, (q, k, v))
  dots = jnp.einsum("bhnd,bhmd->bhnm", q, k) * dim_head ** (-0.5)
  attn = jax.nn.softmax(dots, axis=-1)
  out = jnp.einsum("bhnm,bhmd->bhnd", attn, v)
  B, _, N, _ = out.shape
  out = out.transpose(0, 2, 1, 3).reshape(B, N, inner)
  return out @ params["w_out"] + params["b_out"][0]


if __name__ == "__main__":
  # Small shapes consistent with the module.
  B, N, dim = 2, 8, 32
  heads, dim_head = 4, 16
  inner = heads * dim_head

  key = jax.random.PRNGKey(0)
  kx, k1, k2, k3 = jax.random.split(key, 4)

  x = jax.random.normal(kx, (B, N, dim), dtype=jnp.float32)

  # Deterministic synthetic parameters (stored as [in, out] for y = x @ W).
  params = {
      "gamma": jnp.ones((1, dim), jnp.float32),
      "beta": jnp.zeros((1, dim), jnp.float32),
      "w_qkv": 0.05 * jax.random.normal(k1, (dim, 3 * inner), jnp.float32),
      "w_out": 0.05 * jax.random.normal(k2, (inner, dim), jnp.float32),
      "b_out": 0.01 * jax.random.normal(k3, (1, dim), jnp.float32),
  }

  out = attention_forward(x, params, heads=heads, dim_head=dim_head)
  out = jax.block_until_ready(out)

  ref = reference_forward(x, params, heads=heads, dim_head=dim_head)
  assert out.shape == (B, N, dim)
  # bf16 MXU inputs -> looser tolerance than the pure-f32 reference.
  assert jnp.allclose(out, ref, atol=2e-2, rtol=2e-2), "mismatch vs reference"

  print("KERNEL_OK")
</pallas_src>

<mosaic_0001>
module attributes {stable_mosaic.version = 11 : i64} {
  func.func @attention_kernel(%arg0: i32, %arg1: memref<16x32xf32, #tpu.memory_space<vmem>>, %arg2: memref<1x32xf32, #tpu.memory_space<vmem>>, %arg3: memref<1x32xf32, #tpu.memory_space<vmem>>, %arg4: memref<3x4x32x16xbf16, #tpu.memory_space<vmem>>, %arg5: memref<4x16x32xbf16, #tpu.memory_space<vmem>>, %arg6: memref<1x32xf32, #tpu.memory_space<vmem>>, %arg7: memref<16x32xf32, #tpu.memory_space<vmem>>) attributes {dimension_semantics = [#tpu.dimension_semantics<parallel>], iteration_bounds = array<i64: 1>, scalar_prefetch = 0 : i64, scratch_operands = 0 : i64, tpu.core_type = #tpu.core_type<tc>, window_params = [{transform_indices = @transform_0, window_bounds = array<i64: 16, 32>}, {pipeline_mode = #tpu.pipeline_mode<synchronous>, transform_indices = @transform_1, window_bounds = array<i64: 1, 32>}, {pipeline_mode = #tpu.pipeline_mode<synchronous>, transform_indices = @transform_2, window_bounds = array<i64: 1, 32>}, {pipeline_mode = #tpu.pipeline_mode<synchronous>, transform_indices = @transform_3, window_bounds = array<i64: 3, 4, 32, 16>}, {pipeline_mode = #tpu.pipeline_mode<synchronous>, transform_indices = @transform_4, window_bounds = array<i64: 4, 16, 32>}, {pipeline_mode = #tpu.pipeline_mode<synchronous>, transform_indices = @transform_5, window_bounds = array<i64: 1, 32>}, {transform_indices = @transform_6, window_bounds = array<i64: 16, 32>}]} {
    %c0 = arith.constant 0 : index
    %c0_0 = arith.constant 0 : index
    %0 = vector.load %arg1[%c0, %c0_0] : memref<16x32xf32, #tpu.memory_space<vmem>>, vector<16x32xf32>
    %cst = arith.constant dense<0.000000e+00> : vector<16xf32>
    %1 = vector.multi_reduction <add>, %0, %cst [1] : vector<16x32xf32> to vector<16xf32>
    %2 = vector.shape_cast %1 : vector<16xf32> to vector<16x1xf32>
    %cst_1 = arith.constant 3.200000e+01 : f32
    %3 = vector.broadcast %cst_1 : f32 to vector<16x1xf32>
    %4 = arith.divf %2, %3 : vector<16x1xf32>
    %5 = vector.broadcast %4 : vector<16x1xf32> to vector<16x32xf32>
    %6 = arith.subf %0, %5 : vector<16x32xf32>
    %7 = arith.mulf %6, %6 : vector<16x32xf32>
    %cst_2 = arith.constant dense<0.000000e+00> : vector<16xf32>
    %8 = vector.multi_reduction <add>, %7, %cst_2 [1] : vector<16x32xf32> to vector<16xf32>
    %9 = vector.shape_cast %8 : vector<16xf32> to vector<16x1xf32>
    %cst_3 = arith.constant 3.200000e+01 : f32
    %10 = vector.broadcast %cst_3 : f32 to vector<16x1xf32>
    %11 = arith.divf %9, %10 : vector<16x1xf32>
    %cst_4 = arith.constant 9.99999974E-6 : f32
    %12 = vector.broadcast %cst_4 : f32 to vector<16x1xf32>
    %13 = arith.addf %11, %12 : vector<16x1xf32>
    %14 = math.rsqrt %13 : vector<16x1xf32>
    %15 = vector.broadcast %14 : vector<16x1xf32> to vector<16x32xf32>
    %16 = arith.mulf %6, %15 : vector<16x32xf32>
    %c0_5 = arith.constant 0 : index
    %c0_6 = arith.constant 0 : index
    %17 = vector.load %arg2[%c0_5, %c0_6] : memref<1x32xf32, #tpu.memory_space<vmem>>, vector<1x32xf32>
    %18 = vector.broadcast %17 : vector<1x32xf32> to vector<16x32xf32>
    %19 = arith.mulf %16, %18 : vector<16x32xf32>
    %c0_7 = arith.constant 0 : index
    %c0_8 = arith.constant 0 : index
    %20 = vector.load %arg3[%c0_7, %c0_8] : memref<1x32xf32, #tpu.memory_space<vmem>>, vector<1x32xf32>
    %21 = vector.broadcast %20 : vector<1x32xf32> to vector<16x32xf32>
    %22 = arith.addf %19, %21 : vector<16x32xf32>
    %23 = arith.truncf %22 : vector<16x32xf32> to vector<16x32xbf16>
    %c0_9 = arith.constant 0 : index
    %c0_10 = arith.constant 0 : index
    %24 = vector.load %arg6[%c0_9, %c0_10] : memref<1x32xf32, #tpu.memory_space<vmem>>, vector<1x32xf32>
    %25 = vector.shape_cast %24 : vector<1x32xf32> to vector<1x32xf32>
    %26 = vector.broadcast %25 : vector<1x32xf32> to vector<16x32xf32>
    %c0_11 = arith.constant 0 : index
    %c0_12 = arith.constant 0 : index
    %c0_13 = arith.constant 0 : index
    %c0_14 = arith.constant 0 : index
    %27 = vector.load %arg4[%c0_11, %c0_12, %c0_13, %c0_14] : memref<3x4x32x16xbf16, #tpu.memory_space<vmem>>, vector<1x1x32x16xbf16>
    %28 = vector.shape_cast %27 : vector<1x1x32x16xbf16> to vector<32x16xbf16>
    %cst_15 = arith.constant dense<0.000000e+00> : vector<16x16xf32>
    %29 = tpu.matmul %23, %28, %cst_15 {dimension_numbers = #tpu.dot_dimension_numbers<[1], [0], [0], [1], [0, 0, 1, 1], [], []>} : vector<16x32xbf16>, vector<32x16xbf16>, vector<16x16xf32> -> vector<16x16xf32>
    %c1 = arith.constant 1 : index
    %c0_16 = arith.constant 0 : index
    %c0_17 = arith.constant 0 : index
    %c0_18 = arith.constant 0 : index
    %30 = vector.load %arg4[%c1, %c0_16, %c0_17, %c0_18] : memref<3x4x32x16xbf16, #tpu.memory_space<vmem>>, vector<1x1x32x16xbf16>
    %31 = vector.shape_cast %30 : vector<1x1x32x16xbf16> to vector<32x16xbf16>
    %cst_19 = arith.constant dense<0.000000e+00> : vector<16x16xf32>
    %32 = tpu.matmul %23, %31, %cst_19 {dimension_numbers = #tpu.dot_dimension_numbers<[1], [0], [0], [1], [0, 0, 1, 1], [], []>} : vector<16x32xbf16>, vector<32x16xbf16>, vector<16x16xf32> -> vector<16x16xf32>
    %c2 = arith.constant 2 : index
    %c0_20 = arith.constant 0 : index
    %c0_21 = arith.constant 0 : index
    %c0_22 = arith.constant 0 : index
    %33 = vector.load %arg4[%c2, %c0_20, %c0_21, %c0_22] : memref<3x4x32x16xbf16, #tpu.memory_space<vmem>>, vector<1x1x32x16xbf16>
    %34 = vector.shape_cast %33 : vector<1x1x32x16xbf16> to vector<32x16xbf16>
    %cst_23 = arith.constant dense<0.000000e+00> : vector<16x16xf32>
    %35 = tpu.matmul %23, %34, %cst_23 {dimension_numbers = #tpu.dot_dimension_numbers<[1], [0], [0], [1], [0, 0, 1, 1], [], []>} : vector<16x32xbf16>, vector<32x16xbf16>, vector<16x16xf32> -> vector<16x16xf32>
    %36 = vector.shape_cast %29 : vector<16x16xf32> to vector<2x8x16xf32>
    %37 = arith.truncf %36 : vector<2x8x16xf32> to vector<2x8x16xbf16>
    %38 = vector.shape_cast %32 : vector<16x16xf32> to vector<2x8x16xf32>
    %39 = arith.truncf %38 : vector<2x8x16xf32> to vector<2x8x16xbf16>
    %40 = vector.shape_cast %35 : vector<16x16xf32> to vector<2x8x16xf32>
    %41 = arith.truncf %40 : vector<2x8x16xf32> to vector<2x8x16xbf16>
    "tpu.trace_start"() <{level = 10 : i32, message = "bnd,bmd->bnm"}> : () -> ()
    %cst_24 = arith.constant dense<0.000000e+00> : vector<2x8x8xf32>
    %42 = tpu.matmul %37, %39, %cst_24 {dimension_numbers = #tpu.dot_dimension_numbers<[2], [2], [1], [1], [0, 0, 0, 1, 1, 1], [0], [0]>} : vector<2x8x16xbf16>, vector<2x8x16xbf16>, vector<2x8x8xf32> -> vector<2x8x8xf32>
    "tpu.trace_stop"() : () -> ()
    %cst_25 = arith.constant dense<0xFF800000> : vector<2x8xf32>
    %43 = vector.multi_reduction <maximumf>, %42, %cst_25 [2] : vector<2x8x8xf32> to vector<2x8xf32>
    %44 = vector.shape_cast %43 : vector<2x8xf32> to vector<2x8x1xf32>
    %45 = vector.broadcast %44 : vector<2x8x1xf32> to vector<2x8x8xf32>
    %46 = arith.subf %42, %45 : vector<2x8x8xf32>
    %47 = math.exp %46 : vector<2x8x8xf32>
    %cst_26 = arith.constant dense<0.000000e+00> : vector<2x8xf32>
    %48 = vector.multi_reduction <add>, %47, %cst_26 [2] : vector<2x8x8xf32> to vector<2x8xf32>
    %49 = vector.shape_cast %48 : vector<2x8xf32> to vector<2x8x1xf32>
    %50 = tpu.reciprocal %49 {approx = true} : vector<2x8x1xf32> -> vector<2x8x1xf32>
    %51 = vector.broadcast %50 : vector<2x8x1xf32> to vector<2x8x8xf32>
    %52 = arith.mulf %47, %51 : vector<2x8x8xf32>
    %53 = arith.truncf %52 : vector<2x8x8xf32> to vector<2x8x8xbf16>
    "tpu.trace_start"() <{level = 10 : i32, message = "bnm,bmd->bnd"}> : () -> ()
    %cst_27 = arith.constant dense<0.000000e+00> : vector<2x8x16xf32>
    %54 = tpu.matmul %53, %41, %cst_27 {dimension_numbers = #tpu.dot_dimension_numbers<[2], [1], [1], [2], [0, 0, 0, 1, 1, 2], [0], [0]>} : vector<2x8x8xbf16>, vector<2x8x16xbf16>, vector<2x8x16xf32> -> vector<2x8x16xf32>
    "tpu.trace_stop"() : () -> ()
    %55 = vector.shape_cast %54 : vector<2x8x16xf32> to vector<16x16xf32>
    %56 = arith.truncf %55 : vector<16x16xf32> to vector<16x16xbf16>
    %c0_28 = arith.constant 0 : index
    %c0_29 = arith.constant 0 : index
    %c0_30 = arith.constant 0 : index
    %57 = vector.load %arg5[%c0_28, %c0_29, %c0_30] : memref<4x16x32xbf16, #tpu.memory_space<vmem>>, vector<1x16x32xbf16>
    %58 = vector.shape_cast %57 : vector<1x16x32xbf16> to vector<16x32xbf16>
    %cst_31 = arith.constant dense<0.000000e+00> : vector<16x32xf32>
    %59 = tpu.matmul %56, %58, %cst_31 {dimension_numbers = #tpu.dot_dimension_numbers<[1], [0], [0], [1], [0, 0, 1, 1], [], []>} : vector<16x16xbf16>, vector<16x32xbf16>, vector<16x32xf32> -> vector<16x32xf32>
    %60 = arith.addf %26, %59 : vector<16x32xf32>
    %c0_32 = arith.constant 0 : index
    %c1_33 = arith.constant 1 : index
    %c0_34 = arith.constant 0 : index
    %c0_35 = arith.constant 0 : index
    %61 = vector.load %arg4[%c0_32, %c1_33, %c0_34, %c0_35] : memref<3x4x32x16xbf16, #tpu.memory_space<vmem>>, vector<1x1x32x16xbf16>
    %62 = vector.shape_cast %61 : vector<1x1x32x16xbf16> to vector<32x16xbf16>
    %cst_36 = arith.constant dense<0.000000e+00> : vector<16x16xf32>
    %63 = tpu.matmul %23, %62, %cst_36 {dimension_numbers = #tpu.dot_dimension_numbers<[1], [0], [0], [1], [0, 0, 1, 1], [], []>} : vector<16x32xbf16>, vector<32x16xbf16>, vector<16x16xf32> -> vector<16x16xf32>
    %c1_37 = arith.constant 1 : index
    %c1_38 = arith.constant 1 : index
    %c0_39 = arith.constant 0 : index
    %c0_40 = arith.constant 0 : index
    %64 = vector.load %arg4[%c1_37, %c1_38, %c0_39, %c0_40] : memref<3x4x32x16xbf16, #tpu.memory_space<vmem>>, vector<1x1x32x16xbf16>
    %65 = vector.shape_cast %64 : vector<1x1x32x16xbf16> to vector<32x16xbf16>
    %cst_41 = arith.constant dense<0.000000e+00> : vector<16x16xf32>
    %66 = tpu.matmul %23, %65, %cst_41 {dimension_numbers = #tpu.dot_dimension_numbers<[1], [0], [0], [1], [0, 0, 1, 1], [], []>} : vector<16x32xbf16>, vector<32x16xbf16>, vector<16x16xf32> -> vector<16x16xf32>
    %c2_42 = arith.constant 2 : index
    %c1_43 = arith.constant 1 : index
    %c0_44 = arith.constant 0 : index
    %c0_45 = arith.constant 0 : index
    %67 = vector.load %arg4[%c2_42, %c1_43, %c0_44, %c0_45] : memref<3x4x32x16xbf16, #tpu.memory_space<vmem>>, vector<1x1x32x16xbf16>
    %68 = vector.shape_cast %67 : vector<1x1x32x16xbf16> to vector<32x16xbf16>
    %cst_46 = arith.constant dense<0.000000e+00> : vector<16x16xf32>
    %69 = tpu.matmul %23, %68, %cst_46 {dimension_numbers = #tpu.dot_dimension_numbers<[1], [0], [0], [1], [0, 0, 1, 1], [], []>} : vector<16x32xbf16>, vector<32x16xbf16>, vector<16x16xf32> -> vector<16x16xf32>
    %70 = vector.shape_cast %63 : vector<16x16xf32> to vector<2x8x16xf32>
    %71 = arith.truncf %70 : vector<2x8x16xf32> to vector<2x8x16xbf16>
    %72 = vector.shape_cast %66 : vector<16x16xf32> to vector<2x8x16xf32>
    %73 = arith.truncf %72 : vector<2x8x16xf32> to vector<2x8x16xbf16>
    %74 = vector.shape_cast %69 : vector<16x16xf32> to vector<2x8x16xf32>
    %75 = arith.truncf %74 : vector<2x8x16xf32> to vector<2x8x16xbf16>
    "tpu.trace_start"() <{level = 10 : i32, message = "bnd,bmd->bnm"}> : () -> ()
    %cst_47 = arith.constant dense<0.000000e+00> : vector<2x8x8xf32>
    %76 = tpu.matmul %71, %73, %cst_47 {dimension_numbers = #tpu.dot_dimension_numbers<[2], [2], [1], [1], [0, 0, 0, 1, 1, 1], [0], [0]>} : vector<2x8x16xbf16>, vector<2x8x16xbf16>, vector<2x8x8xf32> -> vector<2x8x8xf32>
    "tpu.trace_stop"() : () -> ()
    %cst_48 = arith.constant dense<0xFF800000> : vector<2x8xf32>
    %77 = vector.multi_reduction <maximumf>, %76, %cst_48 [2] : vector<2x8x8xf32> to vector<2x8xf32>
    %78 = vector.shape_cast %77 : vector<2x8xf32> to vector<2x8x1xf32>
    %79 = vector.broadcast %78 : vector<2x8x1xf32> to vector<2x8x8xf32>
    %80 = arith.subf %76, %79 : vector<2x8x8xf32>
    %81 = math.exp %80 : vector<2x8x8xf32>
    %cst_49 = arith.constant dense<0.000000e+00> : vector<2x8xf32>
    %82 = vector.multi_reduction <add>, %81, %cst_49 [2] : vector<2x8x8xf32> to vector<2x8xf32>
    %83 = vector.shape_cast %82 : vector<2x8xf32> to vector<2x8x1xf32>
    %84 = tpu.reciprocal %83 {approx = true} : vector<2x8x1xf32> -> vector<2x8x1xf32>
    %85 = vector.broadcast %84 : vector<2x8x1xf32> to vector<2x8x8xf32>
    %86 = arith.mulf %81, %85 : vector<2x8x8xf32>
    %87 = arith.truncf %86 : vector<2x8x8xf32> to vector<2x8x8xbf16>
    "tpu.trace_start"() <{level = 10 : i32, message = "bnm,bmd->bnd"}> : () -> ()
    %cst_50 = arith.constant dense<0.000000e+00> : vector<2x8x16xf32>
    %88 = tpu.matmul %87, %75, %cst_50 {dimension_numbers = #tpu.dot_dimension_numbers<[2], [1], [1], [2], [0, 0, 0, 1, 1, 2], [0], [0]>} : vector<2x8x8xbf16>, vector<2x8x16xbf16>, vector<2x8x16xf32> -> vector<2x8x16xf32>
    "tpu.trace_stop"() : () -> ()
    %89 = vector.shape_cast %88 : vector<2x8x16xf32> to vector<16x16xf32>
    %90 = arith.truncf %89 : vector<16x16xf32> to vector<16x16xbf16>
    %c1_51 = arith.constant 1 : index
    %c0_52 = arith.constant 0 : index
    %c0_53 = arith.constant 0 : index
    %91 = vector.load %arg5[%c1_51, %c0_52, %c0_53] : memref<4x16x32xbf16, #tpu.memory_space<vmem>>, vector<1x16x32xbf16>
    %92 = vector.shape_cast %91 : vector<1x16x32xbf16> to vector<16x32xbf16>
    %cst_54 = arith.constant dense<0.000000e+00> : vector<16x32xf32>
    %93 = tpu.matmul %90, %92, %cst_54 {dimension_numbers = #tpu.dot_dimension_numbers<[1], [0], [0], [1], [0, 0, 1, 1], [], []>} : vector<16x16xbf16>, vector<16x32xbf16>, vector<16x32xf32> -> vector<16x32xf32>
    %94 = arith.addf %60, %93 : vector<16x32xf32>
    %c0_55 = arith.constant 0 : index
    %c2_56 = arith.constant 2 : index
    %c0_57 = arith.constant 0 : index
    %c0_58 = arith.constant 0 : index
    %95 = vector.load %arg4[%c0_55, %c2_56, %c0_57, %c0_58] : memref<3x4x32x16xbf16, #tpu.memory_space<vmem>>, vector<1x1x32x16xbf16>
    %96 = vector.shape_cast %95 : vector<1x1x32x16xbf16> to vector<32x16xbf16>
    %cst_59 = arith.constant dense<0.000000e+00> : vector<16x16xf32>
    %97 = tpu.matmul %23, %96, %cst_59 {dimension_numbers = #tpu.dot_dimension_numbers<[1], [0], [0], [1], [0, 0, 1, 1], [], []>} : vector<16x32xbf16>, vector<32x16xbf16>, vector<16x16xf32> -> vector<16x16xf32>
    %c1_60 = arith.constant 1 : index
    %c2_61 = arith.constant 2 : index
    %c0_62 = arith.constant 0 : index
    %c0_63 = arith.constant 0 : index
    %98 = vector.load %arg4[%c1_60, %c2_61, %c0_62, %c0_63] : memref<3x4x32x16xbf16, #tpu.memory_space<vmem>>, vector<1x1x32x16xbf16>
    %99 = vector.shape_cast %98 : vector<1x1x32x16xbf16> to vector<32x16xbf16>
    %cst_64 = arith.constant dense<0.000000e+00> : vector<16x16xf32>
    %100 = tpu.matmul %23, %99, %cst_64 {dimension_numbers = #tpu.dot_dimension_numbers<[1], [0], [0], [1], [0, 0, 1, 1], [], []>} : vector<16x32xbf16>, vector<32x16xbf16>, vector<16x16xf32> -> vector<16x16xf32>
    %c2_65 = arith.constant 2 : index
    %c2_66 = arith.constant 2 : index
    %c0_67 = arith.constant 0 : index
    %c0_68 = arith.constant 0 : index
    %101 = vector.load %arg4[%c2_65, %c2_66, %c0_67, %c0_68] : memref<3x4x32x16xbf16, #tpu.memory_space<vmem>>, vector<1x1x32x16xbf16>
    %102 = vector.shape_cast %101 : vector<1x1x32x16xbf16> to vector<32x16xbf16>
    %cst_69 = arith.constant dense<0.000000e+00> : vector<16x16xf32>
    %103 = tpu.matmul %23, %102, %cst_69 {dimension_numbers = #tpu.dot_dimension_numbers<[1], [0], [0], [1], [0, 0, 1, 1], [], []>} : vector<16x32xbf16>, vector<32x16xbf16>, vector<16x16xf32> -> vector<16x16xf32>
    %104 = vector.shape_cast %97 : vector<16x16xf32> to vector<2x8x16xf32>
    %105 = arith.truncf %104 : vector<2x8x16xf32> to vector<2x8x16xbf16>
    %106 = vector.shape_cast %100 : vector<16x16xf32> to vector<2x8x16xf32>
    %107 = arith.truncf %106 : vector<2x8x16xf32> to vector<2x8x16xbf16>
    %108 = vector.shape_cast %103 : vector<16x16xf32> to vector<2x8x16xf32>
    %109 = arith.truncf %108 : vector<2x8x16xf32> to vector<2x8x16xbf16>
    "tpu.trace_start"() <{level = 10 : i32, message = "bnd,bmd->bnm"}> : () -> ()
    %cst_70 = arith.constant dense<0.000000e+00> : vector<2x8x8xf32>
    %110 = tpu.matmul %105, %107, %cst_70 {dimension_numbers = #tpu.dot_dimension_numbers<[2], [2], [1], [1], [0, 0, 0, 1, 1, 1], [0], [0]>} : vector<2x8x16xbf16>, vector<2x8x16xbf16>, vector<2x8x8xf32> -> vector<2x8x8xf32>
    "tpu.trace_stop"() : () -> ()
    %cst_71 = arith.constant dense<0xFF800000> : vector<2x8xf32>
    %111 = vector.multi_reduction <maximumf>, %110, %cst_71 [2] : vector<2x8x8xf32> to vector<2x8xf32>
    %112 = vector.shape_cast %111 : vector<2x8xf32> to vector<2x8x1xf32>
    %113 = vector.broadcast %112 : vector<2x8x1xf32> to vector<2x8x8xf32>
    %114 = arith.subf %110, %113 : vector<2x8x8xf32>
    %115 = math.exp %114 : vector<2x8x8xf32>
    %cst_72 = arith.constant dense<0.000000e+00> : vector<2x8xf32>
    %116 = vector.multi_reduction <add>, %115, %cst_72 [2] : vector<2x8x8xf32> to vector<2x8xf32>
    %117 = vector.shape_cast %116 : vector<2x8xf32> to vector<2x8x1xf32>
    %118 = tpu.reciprocal %117 {approx = true} : vector<2x8x1xf32> -> vector<2x8x1xf32>
    %119 = vector.broadcast %118 : vector<2x8x1xf32> to vector<2x8x8xf32>
    %120 = arith.mulf %115, %119 : vector<2x8x8xf32>
    %121 = arith.truncf %120 : vector<2x8x8xf32> to vector<2x8x8xbf16>
    "tpu.trace_start"() <{level = 10 : i32, message = "bnm,bmd->bnd"}> : () -> ()
    %cst_73 = arith.constant dense<0.000000e+00> : vector<2x8x16xf32>
    %122 = tpu.matmul %121, %109, %cst_73 {dimension_numbers = #tpu.dot_dimension_numbers<[2], [1], [1], [2], [0, 0, 0, 1, 1, 2], [0], [0]>} : vector<2x8x8xbf16>, vector<2x8x16xbf16>, vector<2x8x16xf32> -> vector<2x8x16xf32>
    "tpu.trace_stop"() : () -> ()
    %123 = vector.shape_cast %122 : vector<2x8x16xf32> to vector<16x16xf32>
    %124 = arith.truncf %123 : vector<16x16xf32> to vector<16x16xbf16>
    %c2_74 = arith.constant 2 : index
    %c0_75 = arith.constant 0 : index
    %c0_76 = arith.constant 0 : index
    %125 = vector.load %arg5[%c2_74, %c0_75, %c0_76] : memref<4x16x32xbf16, #tpu.memory_space<vmem>>, vector<1x16x32xbf16>
    %126 = vector.shape_cast %125 : vector<1x16x32xbf16> to vector<16x32xbf16>
    %cst_77 = arith.constant dense<0.000000e+00> : vector<16x32xf32>
    %127 = tpu.matmul %124, %126, %cst_77 {dimension_numbers = #tpu.dot_dimension_numbers<[1], [0], [0], [1], [0, 0, 1, 1], [], []>} : vector<16x16xbf16>, vector<16x32xbf16>, vector<16x32xf32> -> vector<16x32xf32>
    %128 = arith.addf %94, %127 : vector<16x32xf32>
    %c0_78 = arith.constant 0 : index
    %c3 = arith.constant 3 : index
    %c0_79 = arith.constant 0 : index
    %c0_80 = arith.constant 0 : index
    %129 = vector.load %arg4[%c0_78, %c3, %c0_79, %c0_80] : memref<3x4x32x16xbf16, #tpu.memory_space<vmem>>, vector<1x1x32x16xbf16>
    %130 = vector.shape_cast %129 : vector<1x1x32x16xbf16> to vector<32x16xbf16>
    %cst_81 = arith.constant dense<0.000000e+00> : vector<16x16xf32>
    %131 = tpu.matmul %23, %130, %cst_81 {dimension_numbers = #tpu.dot_dimension_numbers<[1], [0], [0], [1], [0, 0, 1, 1], [], []>} : vector<16x32xbf16>, vector<32x16xbf16>, vector<16x16xf32> -> vector<16x16xf32>
    %c1_82 = arith.constant 1 : index
    %c3_83 = arith.constant 3 : index
    %c0_84 = arith.constant 0 : index
    %c0_85 = arith.constant 0 : index
    %132 = vector.load %arg4[%c1_82, %c3_83, %c0_84, %c0_85] : memref<3x4x32x16xbf16, #tpu.memory_space<vmem>>, vector<1x1x32x16xbf16>
    %133 = vector.shape_cast %132 : vector<1x1x32x16xbf16> to vector<32x16xbf16>
    %cst_86 = arith.constant dense<0.000000e+00> : vector<16x16xf32>
    %134 = tpu.matmul %23, %133, %cst_86 {dimension_numbers = #tpu.dot_dimension_numbers<[1], [0], [0], [1], [0, 0, 1, 1], [], []>} : vector<16x32xbf16>, vector<32x16xbf16>, vector<16x16xf32> -> vector<16x16xf32>
    %c2_87 = arith.constant 2 : index
    %c3_88 = arith.constant 3 : index
    %c0_89 = arith.constant 0 : index
    %c0_90 = arith.constant 0 : index
    %135 = vector.load %arg4[%c2_87, %c3_88, %c0_89, %c0_90] : memref<3x4x32x16xbf16, #tpu.memory_space<vmem>>, vector<1x1x32x16xbf16>
    %136 = vector.shape_cast %135 : vector<1x1x32x16xbf16> to vector<32x16xbf16>
    %cst_91 = arith.constant dense<0.000000e+00> : vector<16x16xf32>
    %137 = tpu.matmul %23, %136, %cst_91 {dimension_numbers = #tpu.dot_dimension_numbers<[1], [0], [0], [1], [0, 0, 1, 1], [], []>} : vector<16x32xbf16>, vector<32x16xbf16>, vector<16x16xf32> -> vector<16x16xf32>
    %138 = vector.shape_cast %131 : vector<16x16xf32> to vector<2x8x16xf32>
    %139 = arith.truncf %138 : vector<2x8x16xf32> to vector<2x8x16xbf16>
    %140 = vector.shape_cast %134 : vector<16x16xf32> to vector<2x8x16xf32>
    %141 = arith.truncf %140 : vector<2x8x16xf32> to vector<2x8x16xbf16>
    %142 = vector.shape_cast %137 : vector<16x16xf32> to vector<2x8x16xf32>
    %143 = arith.truncf %142 : vector<2x8x16xf32> to vector<2x8x16xbf16>
    "tpu.trace_start"() <{level = 10 : i32, message = "bnd,bmd->bnm"}> : () -> ()
    %cst_92 = arith.constant dense<0.000000e+00> : vector<2x8x8xf32>
    %144 = tpu.matmul %139, %141, %cst_92 {dimension_numbers = #tpu.dot_dimension_numbers<[2], [2], [1], [1], [0, 0, 0, 1, 1, 1], [0], [0]>} : vector<2x8x16xbf16>, vector<2x8x16xbf16>, vector<2x8x8xf32> -> vector<2x8x8xf32>
    "tpu.trace_stop"() : () -> ()
    %cst_93 = arith.constant dense<0xFF800000> : vector<2x8xf32>
    %145 = vector.multi_reduction <maximumf>, %144, %cst_93 [2] : vector<2x8x8xf32> to vector<2x8xf32>
    %146 = vector.shape_cast %145 : vector<2x8xf32> to vector<2x8x1xf32>
    %147 = vector.broadcast %146 : vector<2x8x1xf32> to vector<2x8x8xf32>
    %148 = arith.subf %144, %147 : vector<2x8x8xf32>
    %149 = math.exp %148 : vector<2x8x8xf32>
    %cst_94 = arith.constant dense<0.000000e+00> : vector<2x8xf32>
    %150 = vector.multi_reduction <add>, %149, %cst_94 [2] : vector<2x8x8xf32> to vector<2x8xf32>
    %151 = vector.shape_cast %150 : vector<2x8xf32> to vector<2x8x1xf32>
    %152 = tpu.reciprocal %151 {approx = true} : vector<2x8x1xf32> -> vector<2x8x1xf32>
    %153 = vector.broadcast %152 : vector<2x8x1xf32> to vector<2x8x8xf32>
    %154 = arith.mulf %149, %153 : vector<2x8x8xf32>
    %155 = arith.truncf %154 : vector<2x8x8xf32> to vector<2x8x8xbf16>
    "tpu.trace_start"() <{level = 10 : i32, message = "bnm,bmd->bnd"}> : () -> ()
    %cst_95 = arith.constant dense<0.000000e+00> : vector<2x8x16xf32>
    %156 = tpu.matmul %155, %143, %cst_95 {dimension_numbers = #tpu.dot_dimension_numbers<[2], [1], [1], [2], [0, 0, 0, 1, 1, 2], [0], [0]>} : vector<2x8x8xbf16>, vector<2x8x16xbf16>, vector<2x8x16xf32> -> vector<2x8x16xf32>
    "tpu.trace_stop"() : () -> ()
    %157 = vector.shape_cast %156 : vector<2x8x16xf32> to vector<16x16xf32>
    %158 = arith.truncf %157 : vector<16x16xf32> to vector<16x16xbf16>
    %c3_96 = arith.constant 3 : index
    %c0_97 = arith.constant 0 : index
    %c0_98 = arith.constant 0 : index
    %159 = vector.load %arg5[%c3_96, %c0_97, %c0_98] : memref<4x16x32xbf16, #tpu.memory_space<vmem>>, vector<1x16x32xbf16>
    %160 = vector.shape_cast %159 : vector<1x16x32xbf16> to vector<16x32xbf16>
    %cst_99 = arith.constant dense<0.000000e+00> : vector<16x32xf32>
    %161 = tpu.matmul %158, %160, %cst_99 {dimension_numbers = #tpu.dot_dimension_numbers<[1], [0], [0], [1], [0, 0, 1, 1], [], []>} : vector<16x16xbf16>, vector<16x32xbf16>, vector<16x32xf32> -> vector<16x32xf32>
    %162 = arith.addf %128, %161 : vector<16x32xf32>
    %c0_100 = arith.constant 0 : index
    %c0_101 = arith.constant 0 : index
    %163 = vector.load %arg7[%c0_100, %c0_101] : memref<16x32xf32, #tpu.memory_space<vmem>>, vector<16x32xf32>
    tpu.vector_store %arg7[%c0_100, %c0_101], %162 {strides = array<i32>} : memref<16x32xf32, #tpu.memory_space<vmem>>, vector<16x32xf32>,
    return
  }
  func.func @transform_0(%arg0: i32) -> (i32, i32) {
    %c0_i32 = arith.constant 0 : i32
    %c0_i32_0 = arith.constant 0 : i32
    return %arg0, %c0_i32 : i32, i32
  }
  func.func @transform_1(%arg0: i32) -> (i32, i32) {
    %c0_i32 = arith.constant 0 : i32
    %c0_i32_0 = arith.constant 0 : i32
    %c0_i32_1 = arith.constant 0 : i32
    return %c0_i32, %c0_i32_0 : i32, i32
  }
  func.func @transform_2(%arg0: i32) -> (i32, i32) {
    %c0_i32 = arith.constant 0 : i32
    %c0_i32_0 = arith.constant 0 : i32
    %c0_i32_1 = arith.constant 0 : i32
    return %c0_i32, %c0_i32_0 : i32, i32
  }
  func.func @transform_3(%arg0: i32) -> (i32, i32, i32, i32) {
    %c0_i32 = arith.constant 0 : i32
    %c0_i32_0 = arith.constant 0 : i32
    %c0_i32_1 = arith.constant 0 : i32
    %c0_i32_2 = arith.constant 0 : i32
    %c0_i32_3 = arith.constant 0 : i32
    return %c0_i32, %c0_i32_0, %c0_i32_1, %c0_i32_2 : i32, i32, i32, i32
  }
  func.func @transform_4(%arg0: i32) -> (i32, i32, i32) {
    %c0_i32 = arith.constant 0 : i32
    %c0_i32_0 = arith.constant 0 : i32
    %c0_i32_1 = arith.constant 0 : i32
    %c0_i32_2 = arith.constant 0 : i32
    return %c0_i32, %c0_i32_0, %c0_i32_1 : i32, i32, i32
  }
  func.func @transform_5(%arg0: i32) -> (i32, i32) {
    %c0_i32 = arith.constant 0 : i32
    %c0_i32_0 = arith.constant 0 : i32
    %c0_i32_1 = arith.constant 0 : i32
    return %c0_i32, %c0_i32_0 : i32, i32
  }
  func.func @transform_6(%arg0: i32) -> (i32, i32) {
    %c0_i32 = arith.constant 0 : i32
    %c0_i32_0 = arith.constant 0 : i32
    return %arg0, %c0_i32 : i32, i32
  }
}

</mosaic_0001>

<llo_original>
// kernel: tpu_custom_call.1
$region0: #{tpu_custom_call.1}
  #allocation0 [shape = 'u32[]', space=smem, size = 0x4, offset = 0x4, fixed_abs, tag = 'smem constant byte address 0x4 - core index']
  #allocation1 [shape = 'u32[72,128]{1,0:T(1,128)}', space=vmem, size = 0x9000, scoped, tag = 'internal scratch']
  %s0 = inlined_call_operand.vmem [shape: f32[16,32], index: 0, kind: input, shape index: {}]
  %s1 = inlined_call_operand.vmem [shape: f32[1,32], index: 1, kind: input, shape index: {}]
  %s2 = inlined_call_operand.vmem [shape: f32[1,32], index: 2, kind: input, shape index: {}]
  %s3 = inlined_call_operand.vmem [shape: bf16[3,4,32,16], index: 3, kind: input, shape index: {}]
  %s4 = inlined_call_operand.vmem [shape: bf16[4,16,32], index: 4, kind: input, shape index: {}]
  %s5 = inlined_call_operand.vmem [shape: f32[1,32], index: 5, kind: input, shape index: {}]
  %s6 = inlined_call_operand.hbm [shape: f32[16,32], index: 6, kind: output, shape index: {}]
  %s7 = sld [smem:[#allocation0]]
  $region34: #{tpu_custom_call.1} parent=0
    _
  %s9 = ssub.s32 1, %s7
  %s10 = scalar_select 0, %s9, %s7
  $region1: #{tpu_custom_call.1} parent=0
    #allocation2 [shape = 'u8[8192]{0}', space=vmem, size = 0x2000, scoped, tag = 'output window, operand 0, single buffered']
    #allocation3 [shape = 's32[1]{0}', space=sflag, size = 0x4, scoped, tag = 'scoped memory for tpu_custom_call.1']
    %11 = vsyncpa [#allocation3], 0
    // Predicated region
    $region2: #{tpu_custom_call.1} parent=1 // pred_check
      _
    $region3: #{tpu_custom_call.1} parent=1 // pred_check_branch
      %13 = sbr.rel (0) target = $region5
    $region4: #{tpu_custom_call.1} parent=1 // pred_region
      _
    $region5: #{tpu_custom_call.1} parent=1 // pred_fallthru
      _
    // Predicated region
    $region6: #{tpu_custom_call.1} parent=1 // pred_check
      _
    $region7: #{tpu_custom_call.1} parent=1 // pred_check_branch
      %15 = sbr.rel (0) target = $region9
    $region8: #{tpu_custom_call.1} parent=1 // pred_region
      _
    $region9: #{tpu_custom_call.1} parent=1 // pred_fallthru
      _
    // Predicated region
    $region10: #{tpu_custom_call.1} parent=1 // pred_check
      _
    $region11: #{tpu_custom_call.1} parent=1 // pred_check_branch
      %17 = sbr.rel (0) target = $region13
    $region12: #{tpu_custom_call.1} parent=1 // pred_region
      _
    $region13: #{tpu_custom_call.1} parent=1 // pred_fallthru
      _
    // Predicated region
    $region14: #{tpu_custom_call.1} parent=1 // pred_check
      _
    $region15: #{tpu_custom_call.1} parent=1 // pred_check_branch
      %19 = sbr.rel (0) target = $region17
    $region16: #{tpu_custom_call.1} parent=1 // pred_region
      _
    $region17: #{tpu_custom_call.1} parent=1 // pred_fallthru
      _
    // Predicated region
    $region18: #{tpu_custom_call.1} parent=1 // pred_check
      _
    $region19: #{tpu_custom_call.1} parent=1 // pred_check_branch
      %21 = sbr.rel (0) target = $region21
    $region20: #{tpu_custom_call.1} parent=1 // pred_region
      _
    $region21: #{tpu_custom_call.1} parent=1 // pred_fallthru
      _
    // Predicated region
    $region22: #{tpu_custom_call.1} parent=1 // pred_check
      _
    $region23: #{tpu_custom_call.1} parent=1 // pred_check_branch
      %23 = sbr.rel (0) target = $region25
    $region24: #{tpu_custom_call.1} parent=1 // pred_region
      _
    $region25: #{tpu_custom_call.1} parent=1 // pred_fallthru
      _
    %v25 = vld [vmem:[%s0] sm:$0xff]
    %v26 = vld [vmem:[%s0 + $0x8] sm:$0xff]
    %vm27 = vcmask 261120
    %v28 = vsel %vm27, %v25, 0.0
    %29 = vadd.xlane.f32.xlu0 %v28
    %v30 = vpop.xlane.xlu0 %29
    %v31 = vsel %vm27, %v26, 0.0
    %32 = vadd.xlane.f32.xlu0 %v31
    %v33 = vpop.xlane.xlu0 %32
    %v34 = vrcp.pop 32.0
    %v35 = vmul.f32 32.0, %v34
    %v36 = vsub.f32 1.0, %v35
    %v37 = vmul.f32 %v34, %v36
    %v38 = vadd.f32 %v34, %v37
    %vm39 = vweird.f32 %v34
    %v40 = vsel %vm39, %v34, %v38
    %v41 = vmul.f32 %v30, %v40
    %v42 = vmul.f32 %v33, %v40
    %v43 = vsub.f32 %v25, %v41
    %v44 = vsub.f32 %v26, %v42
    %v45 = vmul.f32 %v43, %v43
    %v46 = vmul.f32 %v44, %v44
    %v47 = vsel %vm27, %v45, 0.0
    %48 = vadd.xlane.f32.xlu0 %v47
    %v49 = vpop.xlane.xlu0 %48
    %v50 = vsel %vm27, %v46, 0.0
    %51 = vadd.xlane.f32.xlu0 %v50
    %v52 = vpop.xlane.xlu0 %51
    %v53 = vmul.f32 %v49, %v40
    %v54 = vmul.f32 %v52, %v40
    %v55 = vadd.f32 %v53, 1e-05
    %v56 = vadd.f32 %v54, 1e-05
    %v57 = vrsqrt.pop %v55
    %v58 = vmul.f32 %v57, %v55
    %v59 = vmul.f32 %v58, %v57
    %v60 = vmul.f32 0.5, %v59
    %v61 = vsub.f32 1.5, %v60
    %v62 = vmul.f32 %v57, %v61
    %vm63 = vweird.f32 %v55
    %vm64 = vweird.f32 %v57
    %vm65 = vmor %vm63, %vm64
    %v66 = vsel %vm65, %v57, %v62
    %v67 = vrsqrt.pop %v56
    %v68 = vmul.f32 %v67, %v56
    %v69 = vmul.f32 %v68, %v67
    %v70 = vmul.f32 0.5, %v69
    %v71 = vsub.f32 1.5, %v70
    %v72 = vmul.f32 %v67, %v71
    %vm73 = vweird.f32 %v56
    %vm74 = vweird.f32 %v67
    %vm75 = vmor %vm73, %vm74
    %v76 = vsel %vm75, %v67, %v72
    %v77 = vmul.f32 %v43, %v66
    %v78 = vmul.f32 %v44, %v76
    %v79 = vld [vmem:[%s1] sm:$0x1]
    %v81 = vperm.slane %v79, 0
    %v83 = vmul.f32 %v77, %v81
    %v84 = vmul.f32 %v78, %v81
    %v85 = vld [vmem:[%s2] sm:$0x1]
    %v87 = vperm.slane %v85, 0
    %v89 = vadd.f32 %v83, %v87
    %v90 = vadd.f32 %v84, %v87
    %v91 = vpack.c.bf16 %v90, %v89
    %v92 = vld [vmem:[%s5] sm:$0x1]
    %v94 = vperm.slane %v92, 0
    %v96 = vld [vmem:[%s3] sm:$0xf]
    %v97 = vld [vmem:[%s3 + $0x4] sm:$0xf]
    %v98 = vld [vmem:[%s3 + $0x8] sm:$0xf]
    %v99 = vld [vmem:[%s3 + $0xc] sm:$0xf]
    %v104 = vunpack.c.l.b16 %v96
    %v105 = vunpack.c.l.b16 %v97
    %v106 = vunpack.c.l.b16 %v98
    %v107 = vunpack.c.l.b16 %v99
    %v108 = vpack.c.b16 %v105, %v104
    %v109 = vpack.c.b16 %v107, %v106
    %v113 = vsel %vm27, %v91, 0
    %115 = vmatpush.bf16.msra.mxu0 0
    %116 = vmatpush.bf16.msra.mxu0 0
    %117 = vmatpush.bf16.msra.mxu0 0
    %118 = vmatpush.bf16.msra.mxu0 0
    %119 = vmatpush.bf16.msra.mxu0 0
    %120 = vmatpush.bf16.msra.mxu0 0
    %121 = vmatpush.bf16.msra.mxu0 %v109
    %122 = vmatpush.bf16.msra.mxu0 %v108
    %123 = vmatmul.bf16.gmra.mxu0 %v113
    %v124 = vpop.f32.mrf.mxu0
    %v125 = vadd.f32 0.0, %v124
    %v126 = vpop.f32.mrf.mxu0
    %v127 = vadd.f32 0.0, %v126
    %128 = vdwg.mxu0
    %s129 = scalar_lea.vmem %s3, 64
    %v130 = vld [vmem:[%s129] sm:$0xf]
    %v131 = vld [vmem:[%s129 + $0x4] sm:$0xf]
    %v132 = vld [vmem:[%s129 + $0x8] sm:$0xf]
    %v133 = vld [vmem:[%s129 + $0xc] sm:$0xf]
    %v138 = vunpack.c.l.b16 %v130
    %v139 = vunpack.c.l.b16 %v131
    %v140 = vunpack.c.l.b16 %v132
    %v141 = vunpack.c.l.b16 %v133
    %v142 = vpack.c.b16 %v139, %v138
    %v143 = vpack.c.b16 %v141, %v140
    %146 = vmatpush.bf16.msra.mxu0 0
    %147 = vmatpush.bf16.msra.mxu0 0
    %148 = vmatpush.bf16.msra.mxu0 0
    %149 = vmatpush.bf16.msra.mxu0 0
    %150 = vmatpush.bf16.msra.mxu0 0
    %151 = vmatpush.bf16.msra.mxu0 0
    %152 = vmatpush.bf16.msra.mxu0 %v143
    %153 = vmatpush.bf16.msra.mxu0 %v142
    %154 = vmatmul.bf16.gmra.mxu0 %v113
    %v155 = vpop.f32.mrf.mxu0
    %v156 = vadd.f32 0.0, %v155
    %v157 = vpop.f32.mrf.mxu0
    %v158 = vadd.f32 0.0, %v157
    %159 = vdwg.mxu0
    %s160 = scalar_lea.vmem %s3, 128
    %v161 = vld [vmem:[%s160] sm:$0xf]
    %v162 = vld [vmem:[%s160 + $0x4] sm:$0xf]
    %v163 = vld [vmem:[%s160 + $0x8] sm:$0xf]
    %v164 = vld [vmem:[%s160 + $0xc] sm:$0xf]
    %v169 = vunpack.c.l.b16 %v161
    %v170 = vunpack.c.l.b16 %v162
    %v171 = vunpack.c.l.b16 %v163
    %v172 = vunpack.c.l.b16 %v164
    %v173 = vpack.c.b16 %v170, %v169
    %v174 = vpack.c.b16 %v172, %v171
    %177 = vmatpush.bf16.msra.mxu0 0
    %178 = vmatpush.bf16.msra.mxu0 0
    %179 = vmatpush.bf16.msra.mxu0 0
    %180 = vmatpush.bf16.msra.mxu0 0
    %181 = vmatpush.bf16.msra.mxu0 0
    %182 = vmatpush.bf16.msra.mxu0 0
    %183 = vmatpush.bf16.msra.mxu0 %v174
    %184 = vmatpush.bf16.msra.mxu0 %v173
    %185 = vmatmul.bf16.gmra.mxu0 %v113
    %v186 = vpop.f32.mrf.mxu0
    %v187 = vadd.f32 0.0, %v186
    %v188 = vpop.f32.mrf.mxu0
    %v189 = vadd.f32 0.0, %v188
    %190 = vdwg.mxu0
    %v191 = vpack.c.bf16 %v125, %v125
    %v192 = vpack.c.bf16 %v127, %v127
    %v193 = vpack.c.bf16 %v156, %v156
    %v194 = vpack.c.bf16 %v158, %v158
    %v195 = vpack.c.bf16 %v187, %v187
    %v196 = vpack.c.bf16 %v189, %v189
    %vm197 = vcmask 130048
    %v199 = vsel %vm197, %v191, 0
    %v202 = vsel %vm197, %v193, 0
    %204 = vmatpush.bf16.xpose.msra.mxu0 0
    %205 = vmatpush.bf16.xpose.msra.mxu0 0
    %206 = vmatpush.bf16.xpose.msra.mxu0 0
    %207 = vmatpush.bf16.xpose.msra.mxu0 0
    %208 = vmatpush.bf16.xpose.msra.mxu0 0
    %209 = vmatpush.bf16.xpose.msra.mxu0 0
    %210 = vmatpush.bf16.xpose.msra.mxu0 0
    %211 = vmatpush.bf16.xpose.msra.mxu0 %v202
    %212 = vmatmul.bf16.gmra.mxu0 %v199
    %v213 = vpop.f32.mrf.mxu0
    %v214 = vadd.f32 0.0, %v213
    %v215 = vpop.f32.mrf.mxu0
    %216 = vdwg.mxu0
    %v218 = vsel %vm197, %v192, 0
    %v221 = vsel %vm197, %v194, 0
    %223 = vmatpush.bf16.xpose.msra.mxu0 0
    %224 = vmatpush.bf16.xpose.msra.mxu0 0
    %225 = vmatpush.bf16.xpose.msra.mxu0 0
    %226 = vmatpush.bf16.xpose.msra.mxu0 0
    %227 = vmatpush.bf16.xpose.msra.mxu0 0
    %228 = vmatpush.bf16.xpose.msra.mxu0 0
    %229 = vmatpush.bf16.xpose.msra.mxu0 0
    %230 = vmatpush.bf16.xpose.msra.mxu0 %v221
    %231 = vmatmul.bf16.gmra.mxu0 %v218
    %v232 = vpop.f32.mrf.mxu0
    %v233 = vadd.f32 0.0, %v232
    %v234 = vpop.f32.mrf.mxu0
    %235 = vdwg.mxu0
    %vm236 = vcmask 64512
    %v237 = vsel %vm236, %v214, -inf
    %238 = vmax.xlane.f32.xlu0 %v237
    %v239 = vpop.xlane.xlu0 %238
    %v240 = vsel %vm236, %v233, -inf
    %241 = vmax.xlane.f32.xlu0 %v240
    %v242 = vpop.xlane.xlu0 %241
    %v243 = vsub.f32 %v214, %v239
    %v244 = vsub.f32 %v233, %v242
    %v245 = vmul.f32 %v243, 1.442695
    %v246 = vpow.pop %v245
    %v247 = vmul.f32 %v244, 1.442695
    %v248 = vpow.pop %v247
    %v249 = vsel %vm236, %v246, 0.0
    %250 = vadd.xlane.f32.xlu0 %v249
    %v251 = vpop.xlane.xlu0 %250
    %v252 = vsel %vm236, %v248, 0.0
    %253 = vadd.xlane.f32.xlu0 %v252
    %v254 = vpop.xlane.xlu0 %253
    %v255 = vrcp.pop %v251
    %v256 = vrcp.pop %v254
    %v257 = vmul.f32 %v246, %v255
    %v258 = vmul.f32 %v248, %v256
    %v259 = vpack.c.bf16 %v257, %v257
    %v260 = vpack.c.bf16 %v258, %v258
    %v262 = vsel %vm236, %v259, 0
    %vm264 = vcmask 1043456
    %v266 = vsel %vm264, %v195, 0
    %268 = vmatpush.bf16.msra.mxu0 0
    %269 = vmatpush.bf16.msra.mxu0 0
    %270 = vmatpush.bf16.msra.mxu0 0
    %271 = vmatpush.bf16.msra.mxu0 0
    %272 = vmatpush.bf16.msra.mxu0 0
    %273 = vmatpush.bf16.msra.mxu0 0
    %274 = vmatpush.bf16.msra.mxu0 0
    %275 = vmatpush.bf16.msra.mxu0 %v266
    %276 = vmatmul.bf16.gmra.mxu0 %v262
    %v277 = vpop.f32.mrf.mxu0
    %v278 = vadd.f32 0.0, %v277
    %v279 = vpop.f32.mrf.mxu0
    %280 = vdwg.mxu0
    %v282 = vsel %vm236, %v260, 0
    %v285 = vsel %vm264, %v196, 0
    %287 = vmatpush.bf16.msra.mxu0 0
    %288 = vmatpush.bf16.msra.mxu0 0
    %289 = vmatpush.bf16.msra.mxu0 0
    %290 = vmatpush.bf16.msra.mxu0 0
    %291 = vmatpush.bf16.msra.mxu0 0
    %292 = vmatpush.bf16.msra.mxu0 0
    %293 = vmatpush.bf16.msra.mxu0 0
    %294 = vmatpush.bf16.msra.mxu0 %v285
    %295 = vmatmul.bf16.gmra.mxu0 %v282
    %v296 = vpop.f32.mrf.mxu0
    %v297 = vadd.f32 0.0, %v296
    %v298 = vpop.f32.mrf.mxu0
    %299 = vdwg.mxu0
    %v300 = vpack.c.bf16 %v297, %v278
    %v301 = vld [vmem:[%s4] sm:$0xf]
    %v302 = vld [vmem:[%s4 + $0x4] sm:$0xf]
    %v305 = vunpack.c.l.b16 %v301
    %v306 = vunpack.c.l.b16 %v302
    %v307 = vpack.c.b16 %v306, %v305
    %v310 = vsel %vm197, %v300, 0
    %312 = vmatpush.bf16.msra.mxu0 0
    %313 = vmatpush.bf16.msra.mxu0 0
    %314 = vmatpush.bf16.msra.mxu0 0
    %315 = vmatpush.bf16.msra.mxu0 0
    %316 = vmatpush.bf16.msra.mxu0 0
    %317 = vmatpush.bf16.msra.mxu0 0
    %318 = vmatpush.bf16.msra.mxu0 0
    %319 = vmatpush.bf16.msra.mxu0 %v307
    %320 = vmatmul.bf16.gmra.mxu0 %v310
    %v321 = vpop.f32.mrf.mxu0
    %v322 = vadd.f32 0.0, %v321
    %v323 = vpop.f32.mrf.mxu0
    %v324 = vadd.f32 0.0, %v323
    %325 = vdwg.mxu0
    %v326 = vadd.f32 %v94, %v322
    %v327 = vadd.f32 %v94, %v324
    %s328 = scalar_lea.vmem %s3, 16
    %v329 = vld [vmem:[%s328] sm:$0xf]
    %v330 = vld [vmem:[%s328 + $0x4] sm:$0xf]
    %v331 = vld [vmem:[%s328 + $0x8] sm:$0xf]
    %v332 = vld [vmem:[%s328 + $0xc] sm:$0xf]
    %v337 = vunpack.c.l.b16 %v329
    %v338 = vunpack.c.l.b16 %v330
    %v339 = vunpack.c.l.b16 %v331
    %v340 = vunpack.c.l.b16 %v332
    %v341 = vpack.c.b16 %v338, %v337
    %v342 = vpack.c.b16 %v340, %v339
    %345 = vmatpush.bf16.msra.mxu0 0
    %346 = vmatpush.bf16.msra.mxu0 0
    %347 = vmatpush.bf16.msra.mxu0 0
    %348 = vmatpush.bf16.msra.mxu0 0
    %349 = vmatpush.bf16.msra.mxu0 0
    %350 = vmatpush.bf16.msra.mxu0 0
    %351 = vmatpush.bf16.msra.mxu0 %v342
    %352 = vmatpush.bf16.msra.mxu0 %v341
    %353 = vmatmul.bf16.gmra.mxu0 %v113
    %v354 = vpop.f32.mrf.mxu0
    %v355 = vadd.f32 0.0, %v354
    %v356 = vpop.f32.mrf.mxu0
    %v357 = vadd.f32 0.0, %v356
    %358 = vdwg.mxu0
    %s359 = scalar_lea.vmem %s3, 80
    %v360 = vld [vmem:[%s359] sm:$0xf]
    %v361 = vld [vmem:[%s359 + $0x4] sm:$0xf]
    %v362 = vld [vmem:[%s359 + $0x8] sm:$0xf]
    %v363 = vld [vmem:[%s359 + $0xc] sm:$0xf]
    %v368 = vunpack.c.l.b16 %v360
    %v369 = vunpack.c.l.b16 %v361
    %v370 = vunpack.c.l.b16 %v362
    %v371 = vunpack.c.l.b16 %v363
    %v372 = vpack.c.b16 %v369, %v368
    %v373 = vpack.c.b16 %v371, %v370
    %376 = vmatpush.bf16.msra.mxu0 0
    %377 = vmatpush.bf16.msra.mxu0 0
    %378 = vmatpush.bf16.msra.mxu0 0
    %379 = vmatpush.bf16.msra.mxu0 0
    %380 = vmatpush.bf16.msra.mxu0 0
    %381 = vmatpush.bf16.msra.mxu0 0
    %382 = vmatpush.bf16.msra.mxu0 %v373
    %383 = vmatpush.bf16.msra.mxu0 %v372
    %384 = vmatmul.bf16.gmra.mxu0 %v113
    %v385 = vpop.f32.mrf.mxu0
    %v386 = vadd.f32 0.0, %v385
    %v387 = vpop.f32.mrf.mxu0
    %v388 = vadd.f32 0.0, %v387
    %389 = vdwg.mxu0
    %s390 = scalar_lea.vmem %s3, 144
    %v391 = vld [vmem:[%s390] sm:$0xf]
    %v392 = vld [vmem:[%s390 + $0x4] sm:$0xf]
    %v393 = vld [vmem:[%s390 + $0x8] sm:$0xf]
    %v394 = vld [vmem:[%s390 + $0xc] sm:$0xf]
    %v399 = vunpack.c.l.b16 %v391
    %v400 = vunpack.c.l.b16 %v392
    %v401 = vunpack.c.l.b16 %v393
    %v402 = vunpack.c.l.b16 %v394
    %v403 = vpack.c.b16 %v400, %v399
    %v404 = vpack.c.b16 %v402, %v401
    %407 = vmatpush.bf16.msra.mxu0 0
    %408 = vmatpush.bf16.msra.mxu0 0
    %409 = vmatpush.bf16.msra.mxu0 0
    %410 = vmatpush.bf16.msra.mxu0 0
    %411 = vmatpush.bf16.msra.mxu0 0
    %412 = vmatpush.bf16.msra.mxu0 0
    %413 = vmatpush.bf16.msra.mxu0 %v404
    %414 = vmatpush.bf16.msra.mxu0 %v403
    %415 = vmatmul.bf16.gmra.mxu0 %v113
    %v416 = vpop.f32.mrf.mxu0
    %v417 = vadd.f32 0.0, %v416
    %v418 = vpop.f32.mrf.mxu0
    %v419 = vadd.f32 0.0, %v418
    %420 = vdwg.mxu0
    %v421 = vpack.c.bf16 %v355, %v355
    %v422 = vpack.c.bf16 %v357, %v357
    %v423 = vpack.c.bf16 %v386, %v386
    %v424 = vpack.c.bf16 %v388, %v388
    %v425 = vpack.c.bf16 %v417, %v417
    %v426 = vpack.c.bf16 %v419, %v419
    %v428 = vsel %vm197, %v421, 0
    %v431 = vsel %vm197, %v423, 0
    %433 = vmatpush.bf16.xpose.msra.mxu0 0
    %434 = vmatpush.bf16.xpose.msra.mxu0 0
    %435 = vmatpush.bf16.xpose.msra.mxu0 0
    %436 = vmatpush.bf16.xpose.msra.mxu0 0
    %437 = vmatpush.bf16.xpose.msra.mxu0 0
    %438 = vmatpush.bf16.xpose.msra.mxu0 0
    %439 = vmatpush.bf16.xpose.msra.mxu0 0
    %440 = vmatpush.bf16.xpose.msra.mxu0 %v431
    %441 = vmatmul.bf16.gmra.mxu0 %v428
    %v442 = vpop.f32.mrf.mxu0
    %v443 = vadd.f32 0.0, %v442
    %v444 = vpop.f32.mrf.mxu0
    %445 = vdwg.mxu0
    %v447 = vsel %vm197, %v422, 0
    %v450 = vsel %vm197, %v424, 0
    %452 = vmatpush.bf16.xpose.msra.mxu0 0
    %453 = vmatpush.bf16.xpose.msra.mxu0 0
    %454 = vmatpush.bf16.xpose.msra.mxu0 0
    %455 = vmatpush.bf16.xpose.msra.mxu0 0
    %456 = vmatpush.bf16.xpose.msra.mxu0 0
    %457 = vmatpush.bf16.xpose.msra.mxu0 0
    %458 = vmatpush.bf16.xpose.msra.mxu0 0
    %459 = vmatpush.bf16.xpose.msra.mxu0 %v450
    %460 = vmatmul.bf16.gmra.mxu0 %v447
    %v461 = vpop.f32.mrf.mxu0
    %v462 = vadd.f32 0.0, %v461
    %v463 = vpop.f32.mrf.mxu0
    %464 = vdwg.mxu0
    %v465 = vsel %vm236, %v443, -inf
    %466 = vmax.xlane.f32.xlu0 %v465
    %v467 = vpop.xlane.xlu0 %466
    %v468 = vsel %vm236, %v462, -inf
    %469 = vmax.xlane.f32.xlu0 %v468
    %v470 = vpop.xlane.xlu0 %469
    %v471 = vsub.f32 %v443, %v467
    %v472 = vsub.f32 %v462, %v470
    %v473 = vmul.f32 %v471, 1.442695
    %v474 = vpow.pop %v473
    %v475 = vmul.f32 %v472, 1.442695
    %v476 = vpow.pop %v475
    %v477 = vsel %vm236, %v474, 0.0
    %478 = vadd.xlane.f32.xlu0 %v477
    %v479 = vpop.xlane.xlu0 %478
    %v480 = vsel %vm236, %v476, 0.0
    %481 = vadd.xlane.f32.xlu0 %v480
    %v482 = vpop.xlane.xlu0 %481
    %v483 = vrcp.pop %v479
    %v484 = vrcp.pop %v482
    %v485 = vmul.f32 %v474, %v483
    %v486 = vmul.f32 %v476, %v484
    %v487 = vpack.c.bf16 %v485, %v485
    %v488 = vpack.c.bf16 %v486, %v486
    %v490 = vsel %vm236, %v487, 0
    %v493 = vsel %vm264, %v425, 0
    %495 = vmatpush.bf16.msra.mxu0 0
    %496 = vmatpush.bf16.msra.mxu0 0
    %497 = vmatpush.bf16.msra.mxu0 0
    %498 = vmatpush.bf16.msra.mxu0 0
    %499 = vmatpush.bf16.msra.mxu0 0
    %500 = vmatpush.bf16.msra.mxu0 0
    %501 = vmatpush.bf16.msra.mxu0 0
    %502 = vmatpush.bf16.msra.mxu0 %v493
    %503 = vmatmul.bf16.gmra.mxu0 %v490
    %v504 = vpop.f32.mrf.mxu0
    %v505 = vadd.f32 0.0, %v504
    %v506 = vpop.f32.mrf.mxu0
    %507 = vdwg.mxu0
    %v509 = vsel %vm236, %v488, 0
    %v512 = vsel %vm264, %v426, 0
    %514 = vmatpush.bf16.msra.mxu0 0
    %515 = vmatpush.bf16.msra.mxu0 0
    %516 = vmatpush.bf16.msra.mxu0 0
    %517 = vmatpush.bf16.msra.mxu0 0
    %518 = vmatpush.bf16.msra.mxu0 0
    %519 = vmatpush.bf16.msra.mxu0 0
    %520 = vmatpush.bf16.msra.mxu0 0
    %521 = vmatpush.bf16.msra.mxu0 %v512
    %522 = vmatmul.bf16.gmra.mxu0 %v509
    %v523 = vpop.f32.mrf.mxu0
    %v524 = vadd.f32 0.0, %v523
    %v525 = vpop.f32.mrf.mxu0
    %526 = vdwg.mxu0
    %v527 = vpack.c.bf16 %v524, %v505
    %s528 = scalar_lea.vmem %s4, 8
    %v529 = vld [vmem:[%s528] sm:$0xf]
    %v530 = vld [vmem:[%s528 + $0x4] sm:$0xf]
    %v533 = vunpack.c.l.b16 %v529
    %v534 = vunpack.c.l.b16 %v530
    %v535 = vpack.c.b16 %v534, %v533
    %v538 = vsel %vm197, %v527, 0
    %540 = vmatpush.bf16.msra.mxu0 0
    %541 = vmatpush.bf16.msra.mxu0 0
    %542 = vmatpush.bf16.msra.mxu0 0
    %543 = vmatpush.bf16.msra.mxu0 0
    %544 = vmatpush.bf16.msra.mxu0 0
    %545 = vmatpush.bf16.msra.mxu0 0
    %546 = vmatpush.bf16.msra.mxu0 0
    %547 = vmatpush.bf16.msra.mxu0 %v535
    %548 = vmatmul.bf16.gmra.mxu0 %v538
    %v549 = vpop.f32.mrf.mxu0
    %v550 = vadd.f32 0.0, %v549
    %v551 = vpop.f32.mrf.mxu0
    %v552 = vadd.f32 0.0, %v551
    %553 = vdwg.mxu0
    %v554 = vadd.f32 %v326, %v550
    %v555 = vadd.f32 %v327, %v552
    %s556 = scalar_lea.vmem %s3, 32
    %v557 = vld [vmem:[%s556] sm:$0xf]
    %v558 = vld [vmem:[%s556 + $0x4] sm:$0xf]
    %v559 = vld [vmem:[%s556 + $0x8] sm:$0xf]
    %v560 = vld [vmem:[%s556 + $0xc] sm:$0xf]
    %v565 = vunpack.c.l.b16 %v557
    %v566 = vunpack.c.l.b16 %v558
    %v567 = vunpack.c.l.b16 %v559
    %v568 = vunpack.c.l.b16 %v560
    %v569 = vpack.c.b16 %v566, %v565
    %v570 = vpack.c.b16 %v568, %v567
    %573 = vmatpush.bf16.msra.mxu0 0
    %574 = vmatpush.bf16.msra.mxu0 0
    %575 = vmatpush.bf16.msra.mxu0 0
    %576 = vmatpush.bf16.msra.mxu0 0
    %577 = vmatpush.bf16.msra.mxu0 0
    %578 = vmatpush.bf16.msra.mxu0 0
    %579 = vmatpush.bf16.msra.mxu0 %v570
    %580 = vmatpush.bf16.msra.mxu0 %v569
    %581 = vmatmul.bf16.gmra.mxu0 %v113
    %v582 = vpop.f32.mrf.mxu0
    %v583 = vadd.f32 0.0, %v582
    %v584 = vpop.f32.mrf.mxu0
    %v585 = vadd.f32 0.0, %v584
    %586 = vdwg.mxu0
    %s587 = scalar_lea.vmem %s3, 96
    %v588 = vld [vmem:[%s587] sm:$0xf]
    %v589 = vld [vmem:[%s587 + $0x4] sm:$0xf]
    %v590 = vld [vmem:[%s587 + $0x8] sm:$0xf]
    %v591 = vld [vmem:[%s587 + $0xc] sm:$0xf]
    %v596 = vunpack.c.l.b16 %v588
    %v597 = vunpack.c.l.b16 %v589
    %v598 = vunpack.c.l.b16 %v590
    %v599 = vunpack.c.l.b16 %v591
    %v600 = vpack.c.b16 %v597, %v596
    %v601 = vpack.c.b16 %v599, %v598
    %604 = vmatpush.bf16.msra.mxu0 0
    %605 = vmatpush.bf16.msra.mxu0 0
    %606 = vmatpush.bf16.msra.mxu0 0
    %607 = vmatpush.bf16.msra.mxu0 0
    %608 = vmatpush.bf16.msra.mxu0 0
    %609 = vmatpush.bf16.msra.mxu0 0
    %610 = vmatpush.bf16.msra.mxu0 %v601
    %611 = vmatpush.bf16.msra.mxu0 %v600
    %612 = vmatmul.bf16.gmra.mxu0 %v113
    %v613 = vpop.f32.mrf.mxu0
    %v614 = vadd.f32 0.0, %v613
    %v615 = vpop.f32.mrf.mxu0
    %v616 = vadd.f32 0.0, %v615
    %617 = vdwg.mxu0
    %s618 = scalar_lea.vmem %s3, 160
    %v619 = vld [vmem:[%s618] sm:$0xf]
    %v620 = vld [vmem:[%s618 + $0x4] sm:$0xf]
    %v621 = vld [vmem:[%s618 + $0x8] sm:$0xf]
    %v622 = vld [vmem:[%s618 + $0xc] sm:$0xf]
    %v627 = vunpack.c.l.b16 %v619
    %v628 = vunpack.c.l.b16 %v620
    %v629 = vunpack.c.l.b16 %v621
    %v630 = vunpack.c.l.b16 %v622
    %v631 = vpack.c.b16 %v628, %v627
    %v632 = vpack.c.b16 %v630, %v629
    %635 = vmatpush.bf16.msra.mxu0 0
    %636 = vmatpush.bf16.msra.mxu0 0
    %637 = vmatpush.bf16.msra.mxu0 0
    %638 = vmatpush.bf16.msra.mxu0 0
    %639 = vmatpush.bf16.msra.mxu0 0
    %640 = vmatpush.bf16.msra.mxu0 0
    %641 = vmatpush.bf16.msra.mxu0 %v632
    %642 = vmatpush.bf16.msra.mxu0 %v631
    %643 = vmatmul.bf16.gmra.mxu0 %v113
    %v644 = vpop.f32.mrf.mxu0
    %v645 = vadd.f32 0.0, %v644
    %v646 = vpop.f32.mrf.mxu0
    %v647 = vadd.f32 0.0, %v646
    %648 = vdwg.mxu0
    %v649 = vpack.c.bf16 %v583, %v583
    %v650 = vpack.c.bf16 %v585, %v585
    %v651 = vpack.c.bf16 %v614, %v614
    %v652 = vpack.c.bf16 %v616, %v616
    %v653 = vpack.c.bf16 %v645, %v645
    %v654 = vpack.c.bf16 %v647, %v647
    %v656 = vsel %vm197, %v649, 0
    %v659 = vsel %vm197, %v651, 0
    %661 = vmatpush.bf16.xpose.msra.mxu0 0
    %662 = vmatpush.bf16.xpose.msra.mxu0 0
    %663 = vmatpush.bf16.xpose.msra.mxu0 0
    %664 = vmatpush.bf16.xpose.msra.mxu0 0
    %665 = vmatpush.bf16.xpose.msra.mxu0 0
    %666 = vmatpush.bf16.xpose.msra.mxu0 0
    %667 = vmatpush.bf16.xpose.msra.mxu0 0
    %668 = vmatpush.bf16.xpose.msra.mxu0 %v659
    %669 = vmatmul.bf16.gmra.mxu0 %v656
    %v670 = vpop.f32.mrf.mxu0
    %v671 = vadd.f32 0.0, %v670
    %v672 = vpop.f32.mrf.mxu0
    %673 = vdwg.mxu0
    %v675 = vsel %vm197, %v650, 0
    %v678 = vsel %vm197, %v652, 0
    %680 = vmatpush.bf16.xpose.msra.mxu0 0
    %681 = vmatpush.bf16.xpose.msra.mxu0 0
    %682 = vmatpush.bf16.xpose.msra.mxu0 0
    %683 = vmatpush.bf16.xpose.msra.mxu0 0
    %684 = vmatpush.bf16.xpose.msra.mxu0 0
    %685 = vmatpush.bf16.xpose.msra.mxu0 0
    %686 = vmatpush.bf16.xpose.msra.mxu0 0
    %687 = vmatpush.bf16.xpose.msra.mxu0 %v678
    %688 = vmatmul.bf16.gmra.mxu0 %v675
    %v689 = vpop.f32.mrf.mxu0
    %v690 = vadd.f32 0.0, %v689
    %v691 = vpop.f32.mrf.mxu0
    %692 = vdwg.mxu0
    %v693 = vsel %vm236, %v671, -inf
    %694 = vmax.xlane.f32.xlu0 %v693
    %v695 = vpop.xlane.xlu0 %694
    %v696 = vsel %vm236, %v690, -inf
    %697 = vmax.xlane.f32.xlu0 %v696
    %v698 = vpop.xlane.xlu0 %697
    %v699 = vsub.f32 %v671, %v695
    %v700 = vsub.f32 %v690, %v698
    %v701 = vmul.f32 %v699, 1.442695
    %v702 = vpow.pop %v701
    %v703 = vmul.f32 %v700, 1.442695
    %v704 = vpow.pop %v703
    %v705 = vsel %vm236, %v702, 0.0
    %706 = vadd.xlane.f32.xlu0 %v705
    %v707 = vpop.xlane.xlu0 %706
    %v708 = vsel %vm236, %v704, 0.0
    %709 = vadd.xlane.f32.xlu0 %v708
    %v710 = vpop.xlane.xlu0 %709
    %v711 = vrcp.pop %v707
    %v712 = vrcp.pop %v710
    %v713 = vmul.f32 %v702, %v711
    %v714 = vmul.f32 %v704, %v712
    %v715 = vpack.c.bf16 %v713, %v713
    %v716 = vpack.c.bf16 %v714, %v714
    %v718 = vsel %vm236, %v715, 0
    %v721 = vsel %vm264, %v653, 0
    %723 = vmatpush.bf16.msra.mxu0 0
    %724 = vmatpush.bf16.msra.mxu0 0
    %725 = vmatpush.bf16.msra.mxu0 0
    %726 = vmatpush.bf16.msra.mxu0 0
    %727 = vmatpush.bf16.msra.mxu0 0
    %728 = vmatpush.bf16.msra.mxu0 0
    %729 = vmatpush.bf16.msra.mxu0 0
    %730 = vmatpush.bf16.msra.mxu0 %v721
    %731 = vmatmul.bf16.gmra.mxu0 %v718
    %v732 = vpop.f32.mrf.mxu0
    %v733 = vadd.f32 0.0, %v732
    %v734 = vpop.f32.mrf.mxu0
    %735 = vdwg.mxu0
    %v737 = vsel %vm236, %v716, 0
    %v740 = vsel %vm264, %v654, 0
    %742 = vmatpush.bf16.msra.mxu0 0
    %743 = vmatpush.bf16.msra.mxu0 0
    %744 = vmatpush.bf16.msra.mxu0 0
    %745 = vmatpush.bf16.msra.mxu0 0
    %746 = vmatpush.bf16.msra.mxu0 0
    %747 = vmatpush.bf16.msra.mxu0 0
    %748 = vmatpush.bf16.msra.mxu0 0
    %749 = vmatpush.bf16.msra.mxu0 %v740
    %750 = vmatmul.bf16.gmra.mxu0 %v737
    %v751 = vpop.f32.mrf.mxu0
    %v752 = vadd.f32 0.0, %v751
    %v753 = vpop.f32.mrf.mxu0
    %754 = vdwg.mxu0
    %v755 = vpack.c.bf16 %v752, %v733
    %s756 = scalar_lea.vmem %s4, 16
    %v757 = vld [vmem:[%s756] sm:$0xf]
    %v758 = vld [vmem:[%s756 + $0x4] sm:$0xf]
    %v761 = vunpack.c.l.b16 %v757
    %v762 = vunpack.c.l.b16 %v758
    %v763 = vpack.c.b16 %v762, %v761
    %v766 = vsel %vm197, %v755, 0
    %768 = vmatpush.bf16.msra.mxu0 0
    %769 = vmatpush.bf16.msra.mxu0 0
    %770 = vmatpush.bf16.msra.mxu0 0
    %771 = vmatpush.bf16.msra.mxu0 0
    %772 = vmatpush.bf16.msra.mxu0 0
    %773 = vmatpush.bf16.msra.mxu0 0
    %774 = vmatpush.bf16.msra.mxu0 0
    %775 = vmatpush.bf16.msra.mxu0 %v763
    %776 = vmatmul.bf16.gmra.mxu0 %v766
    %v777 = vpop.f32.mrf.mxu0
    %v778 = vadd.f32 0.0, %v777
    %v779 = vpop.f32.mrf.mxu0
    %v780 = vadd.f32 0.0, %v779
    %781 = vdwg.mxu0
    %v782 = vadd.f32 %v554, %v778
    %v783 = vadd.f32 %v555, %v780
    %s784 = scalar_lea.vmem %s3, 48
    %v785 = vld [vmem:[%s784] sm:$0xf]
    %v786 = vld [vmem:[%s784 + $0x4] sm:$0xf]
    %v787 = vld [vmem:[%s784 + $0x8] sm:$0xf]
    %v788 = vld [vmem:[%s784 + $0xc] sm:$0xf]
    %v793 = vunpack.c.l.b16 %v785
    %v794 = vunpack.c.l.b16 %v786
    %v795 = vunpack.c.l.b16 %v787
    %v796 = vunpack.c.l.b16 %v788
    %v797 = vpack.c.b16 %v794, %v793
    %v798 = vpack.c.b16 %v796, %v795
    %801 = vmatpush.bf16.msra.mxu0 0
    %802 = vmatpush.bf16.msra.mxu0 0
    %803 = vmatpush.bf16.msra.mxu0 0
    %804 = vmatpush.bf16.msra.mxu0 0
    %805 = vmatpush.bf16.msra.mxu0 0
    %806 = vmatpush.bf16.msra.mxu0 0
    %807 = vmatpush.bf16.msra.mxu0 %v798
    %808 = vmatpush.bf16.msra.mxu0 %v797
    %809 = vmatmul.bf16.gmra.mxu0 %v113
    %v810 = vpop.f32.mrf.mxu0
    %v811 = vadd.f32 0.0, %v810
    %v812 = vpop.f32.mrf.mxu0
    %v813 = vadd.f32 0.0, %v812
    %814 = vdwg.mxu0
    %s815 = scalar_lea.vmem %s3, 112
    %v816 = vld [vmem:[%s815] sm:$0xf]
    %v817 = vld [vmem:[%s815 + $0x4] sm:$0xf]
    %v818 = vld [vmem:[%s815 + $0x8] sm:$0xf]
    %v819 = vld [vmem:[%s815 + $0xc] sm:$0xf]
    %v824 = vunpack.c.l.b16 %v816
    %v825 = vunpack.c.l.b16 %v817
    %v826 = vunpack.c.l.b16 %v818
    %v827 = vunpack.c.l.b16 %v819
    %v828 = vpack.c.b16 %v825, %v824
    %v829 = vpack.c.b16 %v827, %v826
    %832 = vmatpush.bf16.msra.mxu0 0
    %833 = vmatpush.bf16.msra.mxu0 0
    %834 = vmatpush.bf16.msra.mxu0 0
    %835 = vmatpush.bf16.msra.mxu0 0
    %836 = vmatpush.bf16.msra.mxu0 0
    %837 = vmatpush.bf16.msra.mxu0 0
    %838 = vmatpush.bf16.msra.mxu0 %v829
    %839 = vmatpush.bf16.msra.mxu0 %v828
    %840 = vmatmul.bf16.gmra.mxu0 %v113
    %v841 = vpop.f32.mrf.mxu0
    %v842 = vadd.f32 0.0, %v841
    %v843 = vpop.f32.mrf.mxu0
    %v844 = vadd.f32 0.0, %v843
    %845 = vdwg.mxu0
    %s846 = scalar_lea.vmem %s3, 176
    %v847 = vld [vmem:[%s846] sm:$0xf]
    %v848 = vld [vmem:[%s846 + $0x4] sm:$0xf]
    %v849 = vld [vmem:[%s846 + $0x8] sm:$0xf]
    %v850 = vld [vmem:[%s846 + $0xc] sm:$0xf]
    %v855 = vunpack.c.l.b16 %v847
    %v856 = vunpack.c.l.b16 %v848
    %v857 = vunpack.c.l.b16 %v849
    %v858 = vunpack.c.l.b16 %v850
    %v859 = vpack.c.b16 %v856, %v855
    %v860 = vpack.c.b16 %v858, %v857
    %863 = vmatpush.bf16.msra.mxu0 0
    %864 = vmatpush.bf16.msra.mxu0 0
    %865 = vmatpush.bf16.msra.mxu0 0
    %866 = vmatpush.bf16.msra.mxu0 0
    %867 = vmatpush.bf16.msra.mxu0 0
    %868 = vmatpush.bf16.msra.mxu0 0
    %869 = vmatpush.bf16.msra.mxu0 %v860
    %870 = vmatpush.bf16.msra.mxu0 %v859
    %871 = vmatmul.bf16.gmra.mxu0 %v113
    %v872 = vpop.f32.mrf.mxu0
    %v873 = vadd.f32 0.0, %v872
    %v874 = vpop.f32.mrf.mxu0
    %v875 = vadd.f32 0.0, %v874
    %876 = vdwg.mxu0
    %v877 = vpack.c.bf16 %v811, %v811
    %v878 = vpack.c.bf16 %v813, %v813
    %v879 = vpack.c.bf16 %v842, %v842
    %v880 = vpack.c.bf16 %v844, %v844
    %v881 = vpack.c.bf16 %v873, %v873
    %v882 = vpack.c.bf16 %v875, %v875
    %v884 = vsel %vm197, %v877, 0
    %v887 = vsel %vm197, %v879, 0
    %889 = vmatpush.bf16.xpose.msra.mxu0 0
    %890 = vmatpush.bf16.xpose.msra.mxu0 0
    %891 = vmatpush.bf16.xpose.msra.mxu0 0
    %892 = vmatpush.bf16.xpose.msra.mxu0 0
    %893 = vmatpush.bf16.xpose.msra.mxu0 0
    %894 = vmatpush.bf16.xpose.msra.mxu0 0
    %895 = vmatpush.bf16.xpose.msra.mxu0 0
    %896 = vmatpush.bf16.xpose.msra.mxu0 %v887
    %897 = vmatmul.bf16.gmra.mxu0 %v884
    %v898 = vpop.f32.mrf.mxu0
    %v899 = vadd.f32 0.0, %v898
    %v900 = vpop.f32.mrf.mxu0
    %901 = vdwg.mxu0
    %v903 = vsel %vm197, %v878, 0
    %v906 = vsel %vm197, %v880, 0
    %908 = vmatpush.bf16.xpose.msra.mxu0 0
    %909 = vmatpush.bf16.xpose.msra.mxu0 0
    %910 = vmatpush.bf16.xpose.msra.mxu0 0
    %911 = vmatpush.bf16.xpose.msra.mxu0 0
    %912 = vmatpush.bf16.xpose.msra.mxu0 0
    %913 = vmatpush.bf16.xpose.msra.mxu0 0
    %914 = vmatpush.bf16.xpose.msra.mxu0 0
    %915 = vmatpush.bf16.xpose.msra.mxu0 %v906
    %916 = vmatmul.bf16.gmra.mxu0 %v903
    %v917 = vpop.f32.mrf.mxu0
    %v918 = vadd.f32 0.0, %v917
    %v919 = vpop.f32.mrf.mxu0
    %920 = vdwg.mxu0
    %v921 = vsel %vm236, %v899, -inf
    %922 = vmax.xlane.f32.xlu0 %v921
    %v923 = vpop.xlane.xlu0 %922
    %v924 = vsel %vm236, %v918, -inf
    %925 = vmax.xlane.f32.xlu0 %v924
    %v926 = vpop.xlane.xlu0 %925
    %v927 = vsub.f32 %v899, %v923
    %v928 = vsub.f32 %v918, %v926
    %v929 = vmul.f32 %v927, 1.442695
    %v930 = vpow.pop %v929
    %v931 = vmul.f32 %v928, 1.442695
    %v932 = vpow.pop %v931
    %v933 = vsel %vm236, %v930, 0.0
    %934 = vadd.xlane.f32.xlu0 %v933
    %v935 = vpop.xlane.xlu0 %934
    %v936 = vsel %vm236, %v932, 0.0
    %937 = vadd.xlane.f32.xlu0 %v936
    %v938 = vpop.xlane.xlu0 %937
    %v939 = vrcp.pop %v935
    %v940 = vrcp.pop %v938
    %v941 = vmul.f32 %v930, %v939
    %v942 = vmul.f32 %v932, %v940
    %v943 = vpack.c.bf16 %v941, %v941
    %v944 = vpack.c.bf16 %v942, %v942
    %v946 = vsel %vm236, %v943, 0
    %v949 = vsel %vm264, %v881, 0
    %951 = vmatpush.bf16.msra.mxu0 0
    %952 = vmatpush.bf16.msra.mxu0 0
    %953 = vmatpush.bf16.msra.mxu0 0
    %954 = vmatpush.bf16.msra.mxu0 0
    %955 = vmatpush.bf16.msra.mxu0 0
    %956 = vmatpush.bf16.msra.mxu0 0
    %957 = vmatpush.bf16.msra.mxu0 0
    %958 = vmatpush.bf16.msra.mxu0 %v949
    %959 = vmatmul.bf16.gmra.mxu0 %v946
    %v960 = vpop.f32.mrf.mxu0
    %v961 = vadd.f32 0.0, %v960
    %v962 = vpop.f32.mrf.mxu0
    %963 = vdwg.mxu0
    %v965 = vsel %vm236, %v944, 0
    %v968 = vsel %vm264, %v882, 0
    %970 = vmatpush.bf16.msra.mxu0 0
    %971 = vmatpush.bf16.msra.mxu0 0
    %972 = vmatpush.bf16.msra.mxu0 0
    %973 = vmatpush.bf16.msra.mxu0 0
    %974 = vmatpush.bf16.msra.mxu0 0
    %975 = vmatpush.bf16.msra.mxu0 0
    %976 = vmatpush.bf16.msra.mxu0 0
    %977 = vmatpush.bf16.msra.mxu0 %v968
    %978 = vmatmul.bf16.gmra.mxu0 %v965
    %v979 = vpop.f32.mrf.mxu0
    %v980 = vadd.f32 0.0, %v979
    %v981 = vpop.f32.mrf.mxu0
    %982 = vdwg.mxu0
    %v983 = vpack.c.bf16 %v980, %v961
    %s984 = scalar_lea.vmem %s4, 24
    %v985 = vld [vmem:[%s984] sm:$0xf]
    %v986 = vld [vmem:[%s984 + $0x4] sm:$0xf]
    %v989 = vunpack.c.l.b16 %v985
    %v990 = vunpack.c.l.b16 %v986
    %v991 = vpack.c.b16 %v990, %v989
    %v994 = vsel %vm197, %v983, 0
    %996 = vmatpush.bf16.msra.mxu0 0
    %997 = vmatpush.bf16.msra.mxu0 0
    %998 = vmatpush.bf16.msra.mxu0 0
    %999 = vmatpush.bf16.msra.mxu0 0
    %1000 = vmatpush.bf16.msra.mxu0 0
    %1001 = vmatpush.bf16.msra.mxu0 0
    %1002 = vmatpush.bf16.msra.mxu0 0
    %1003 = vmatpush.bf16.msra.mxu0 %v991
    %1004 = vmatmul.bf16.gmra.mxu0 %v994
    %v1005 = vpop.f32.mrf.mxu0
    %v1006 = vadd.f32 0.0, %v1005
    %v1007 = vpop.f32.mrf.mxu0
    %v1008 = vadd.f32 0.0, %v1007
    %1009 = vdwg.mxu0
    %v1010 = vadd.f32 %v782, %v1006
    %v1011 = vadd.f32 %v783, %v1008
    %1012 = vst.msk [vmem:[#allocation2] sm:$0xff] %vm27, %v1010
    %1013 = vst.msk [vmem:[#allocation2 + $0x8] sm:$0xff] %vm27, %v1011
    // Predicated region
    $region26: #{tpu_custom_call.1} parent=1 // pred_check
      _
    $region27: #{tpu_custom_call.1} parent=1 // pred_check_branch
      %1015 = sbr.rel (0) target = $region29
    $region28: #{tpu_custom_call.1} parent=1 // pred_region
      %1017 = vsyncadd [#allocation3], 0
      %s1018 = sshll.u32 [#allocation2], 4
      %s1019 = int_to_ptr.vmem [resolvable:$true] %s1018
      %s1020 = sshll.u32 %s6, 4
      %s1021 = int_to_ptr.hbm [resolvable:$true] %s1020
      %1026 = dma.vmem_to_hbm [thread:$0]  %s1019, 256, %s1021, [#allocation3], 128, 128, 8
    $region29: #{tpu_custom_call.1} parent=1 // pred_fallthru
      _
    // Predicated region
    $region30: #{tpu_custom_call.1} parent=1 // pred_check
      _
    $region31: #{tpu_custom_call.1} parent=1 // pred_check_branch
      %1028 = sbr.rel (0) target = $region33
    $region32: #{tpu_custom_call.1} parent=1 // pred_region
      %1030 = dma.done [#allocation3], 256
    $region33: #{tpu_custom_call.1} parent=1 // pred_fallthru
      _
    %1031 = vsyncpa [#allocation3], 1

</llo_original>
